<compile_context>
chip_gen: v5e
topology: v5e:2x2
jax: 0.10.0
libtpu: 0.0.40
codegen_flags: <defaults>
</compile_context>

<pallas_src>
import jax
import jax.numpy as jnp
from functools import partial
from jax.experimental import pallas as pl
from jax.experimental.pallas import tpu as pltpu

# ---- hyper-params implied by the module (args.*) -----------------------------
USER = 8          # args.user
ITEM = 8          # args.item
LATDIM = 32       # args.latdim
GNN_LAYER = 3     # args.gnn_layer
NNZ = 64          # adj.nnz()
N = USER + ITEM
LANE = 128        # TPU lane width
SUBLANE = 8       # TPU sublane count


# ---- fused Pallas kernel ------------------------------------------------------
def _lightgcn_fused_kernel(coo_ref, emb_ref, out_ref, *, layer_num, n):
    """Fused LightGCN_sp forward.

    coo_ref: (8, nnz_pad) int32 slab
        row 0: COO row indices   (padded entries = n  -> out of range)
        row 1: COO col indices   (padded entries = n)
        row 2: vals              (f32 bitcast to i32; padded entries = 0.0)
        row 3: adj_mask1_train   (f32 bitcast)
        row 4: adj_mask2_fixed   (f32 bitcast)
        rows 5-7: zero padding to an 8-sublane tile
    emb_ref: (2n, d_pad) f32 -- [emb_mask2_fixed ; concat(uEmbeds, iEmbeds)]
    out_ref: (n, d_pad)  f32 -- sum of all propagation orders
    """
    nnz = coo_ref.shape[1]
    coo = coo_ref[...]                                     # one full-lane load
    rows = coo[0:1, :]                                     # (1, nnz) int32
    cols = coo[1:2, :]                                     # (1, nnz) int32
    vals = pltpu.bitcast(coo[2:3, :], jnp.float32)         # (1, nnz) f32
    m1 = pltpu.bitcast(coo[3:4, :], jnp.float32)
    m2 = pltpu.bitcast(coo[4:5, :], jnp.float32)

    # adj.mul_nnz(adj_mask1_train).mul_nnz(adj_mask2_fixed)
    vals_m = vals * m1 * m2                                # (1, nnz)

    # Exact COO -> dense adjacency (duplicate coordinates are summed, exactly
    # like sparse matmul / scatter-add).  Both one-hots are lane-dense (n, nnz)
    # compares against the same iota; vals are folded into the row select so no
    # extra (n, nnz) multiply pass is needed.  Padded nnz entries have
    # row/col == n (never matches) and val == 0, so they contribute nothing.
    iota_n = jax.lax.broadcasted_iota(jnp.int32, (n, nnz), 0)
    row_oh = jnp.where(iota_n == rows, vals_m, 0.0)        # (n, nnz), scaled
    col_oh = jnp.where(iota_n == cols, 1.0, 0.0)           # (n, nnz)
    adj = jax.lax.dot_general(                             # contract shared nnz axis
        row_oh, col_oh,
        dimension_numbers=(((1,), (1,)), ((), ())),
        preferred_element_type=jnp.float32)                # (n, n)

    # embeds = emb_mask2_fixed * concat(uEmbeds, iEmbeds)   (lane-padded to 128)
    emb = emb_ref[...]
    e = emb[0:n, :] * emb[n:2 * n, :]
    acc = e
    # embedsLst = [e0, A@e0, A@(A@e0), ...]; output = sum(embedsLst)
    # TODO(synk): at production sizes switch to a row-tiled grid
    # (PrefetchScalarGridSpec with scalar-prefetched COO offsets), cast MXU
    # operands to bf16 (keep f32 accumulation / elementwise), add
    # dimension_semantics=("parallel", ...) for v7x's 2 TensorCores, and
    # re-derive tile sizes against v7x's 64 MiB VMEM (vmem_limit_bytes).
    for _ in range(layer_num):
        e = jnp.dot(adj, e, preferred_element_type=jnp.float32)
        acc = acc + e
    out_ref[...] = acc                                     # full-lane (unmasked) store


# ---- wrapper (single dispatch) ------------------------------------------------
@partial(jax.jit, static_argnames=("layer_num",))
def lightgcn_sp_forward(rows, cols, vals, adj_mask1, adj_mask2,
                        u_embeds, i_embeds, emb_mask, layer_num=GNN_LAYER):
    nnz = vals.shape[0]
    n_user = u_embeds.shape[0]
    n = n_user + i_embeds.shape[0]
    d = u_embeds.shape[1]
    d_pad = ((d + LANE - 1) // LANE) * LANE                # lane-dense latent dim
    nnz_pad = ((nnz + LANE - 1) // LANE) * LANE            # lane-dense nnz (>= 128)

    # Pack the five tiny COO arrays into one (8, nnz_pad) int32 slab.  Padded
    # coordinates use the out-of-range index `n` and zero values so the
    # in-kernel one-hot compare drops them exactly.
    pad = nnz_pad - nnz
    rows_p = jnp.pad(rows.astype(jnp.int32), (0, pad), constant_values=n)
    cols_p = jnp.pad(cols.astype(jnp.int32), (0, pad), constant_values=n)
    vals_p = jnp.pad(vals.astype(jnp.float32), (0, pad))
    m1_p = jnp.pad(adj_mask1.astype(jnp.float32), (0, pad))
    m2_p = jnp.pad(adj_mask2.astype(jnp.float32), (0, pad))
    coo = jnp.stack([rows_p, cols_p,
                     jax.lax.bitcast_convert_type(vals_p, jnp.int32),
                     jax.lax.bitcast_convert_type(m1_p, jnp.int32),
                     jax.lax.bitcast_convert_type(m2_p, jnp.int32)], axis=0)
    coo = jnp.pad(coo, ((0, SUBLANE - coo.shape[0]), (0, 0)))   # (8, nnz_pad)

    # One (2n, d_pad) slab: [mask ; embeds].  Mask multiply stays in-kernel
    # (pre-multiplying in the wrapper would just be an un-hidden XLA op).
    embeds = jnp.concatenate([u_embeds, i_embeds], axis=0)
    embeds_p = jnp.pad(embeds, ((0, 0), (0, d_pad - d)))
    mask_p = jnp.pad(emb_mask.astype(jnp.float32), ((0, 0), (0, d_pad - d)))
    emb_stack = jnp.concatenate([mask_p, embeds_p], axis=0)      # (2n, d_pad)

    out = pl.pallas_call(
        partial(_lightgcn_fused_kernel, layer_num=layer_num, n=n),
        out_shape=jax.ShapeDtypeStruct((n, d_pad), jnp.float32),
        in_specs=[pl.BlockSpec((SUBLANE, nnz_pad), lambda: (0, 0)),
                  pl.BlockSpec((2 * n, d_pad), lambda: (0, 0))],
        out_specs=pl.BlockSpec((n, d_pad), lambda: (0, 0)),
    )(coo, emb_stack)

    out = out[:, :d]
    # forward(..., getMultOrder=False, getTogether=False)
    return out[:n_user], out[n_user:]


# ---- deterministic parameter / input construction ------------------------------
def xavier_uniform(key, shape):
    # PyTorch xavier_uniform_ on a 2-D tensor: fan_in = shape[1], fan_out = shape[0]
    fan_in, fan_out = shape[1], shape[0]
    bound = (6.0 / (fan_in + fan_out)) ** 0.5
    return jax.random.uniform(key, shape, jnp.float32, -bound, bound)


def reference_forward(rows, cols, vals, m1, m2, u_e, i_e, emb_mask, layer_num):
    vals_m = vals * m1 * m2
    adj = jnp.zeros((N, N), jnp.float32).at[rows, cols].add(vals_m)
    e = emb_mask * jnp.concatenate([u_e, i_e], axis=0)
    acc = e
    for _ in range(layer_num):
        e = adj @ e
        acc = acc + e
    return acc[:USER], acc[USER:]


if __name__ == "__main__":
    key = jax.random.PRNGKey(0)
    ku, ki, kr, kc = jax.random.split(key, 4)

    # Module parameters (__init__)
    uEmbeds = xavier_uniform(ku, (USER, LATDIM))
    iEmbeds = xavier_uniform(ki, (ITEM, LATDIM))
    adj_mask1_train = jnp.ones((NNZ,), jnp.float32)
    adj_mask2_fixed = jnp.ones((NNZ,), jnp.float32)
    emb_mask2_fixed = jnp.ones((N, LATDIM), jnp.float32)

    # Synthetic sparse COO adjacency (normalized-ish values).
    rows = jax.random.randint(kr, (NNZ,), 0, N)
    cols = jax.random.randint(kc, (NNZ,), 0, N)
    vals = jnp.full((NNZ,), 1.0 / N, jnp.float32)

    u_out, i_out = lightgcn_sp_forward(rows, cols, vals,
                                       adj_mask1_train, adj_mask2_fixed,
                                       uEmbeds, iEmbeds, emb_mask2_fixed)
    jax.block_until_ready((u_out, i_out))

    u_ref, i_ref = reference_forward(rows, cols, vals,
                                     adj_mask1_train, adj_mask2_fixed,
                                     uEmbeds, iEmbeds, emb_mask2_fixed,
                                     GNN_LAYER)
    assert u_out.shape == (USER, LATDIM) and i_out.shape == (ITEM, LATDIM)
    assert jnp.allclose(u_out, u_ref, atol=1e-5, rtol=1e-5)
    assert jnp.allclose(i_out, i_ref, atol=1e-5, rtol=1e-5)

    print("KERNEL_OK")
</pallas_src>

<mosaic_0001>
module attributes {stable_mosaic.version = 11 : i64} {
  func.func @_lightgcn_fused_kernel(%arg0: memref<8x128xi32, #tpu.memory_space<vmem>>, %arg1: memref<32x128xf32, #tpu.memory_space<vmem>>, %arg2: memref<16x128xf32, #tpu.memory_space<vmem>>) attributes {dimension_semantics = [], scalar_prefetch = 0 : i64, scratch_operands = 0 : i64, tpu.core_type = #tpu.core_type<tc>} {
    %c0 = arith.constant 0 : index
    %c0_0 = arith.constant 0 : index
    %0 = vector.load %arg0[%c0, %c0_0] : memref<8x128xi32, #tpu.memory_space<vmem>>, vector<8x128xi32>
    %1 = vector.extract_strided_slice %0 {offsets = [0, 0], sizes = [1, 128], strides = [1, 1]} : vector<8x128xi32> to vector<1x128xi32>
    %2 = vector.extract_strided_slice %0 {offsets = [1, 0], sizes = [1, 128], strides = [1, 1]} : vector<8x128xi32> to vector<1x128xi32>
    %3 = vector.extract_strided_slice %0 {offsets = [2, 0], sizes = [1, 128], strides = [1, 1]} : vector<8x128xi32> to vector<1x128xi32>
    %4 = tpu.bitcast %3 : vector<1x128xi32> -> vector<1x128xf32>
    %5 = vector.extract_strided_slice %0 {offsets = [3, 0], sizes = [1, 128], strides = [1, 1]} : vector<8x128xi32> to vector<1x128xi32>
    %6 = tpu.bitcast %5 : vector<1x128xi32> -> vector<1x128xf32>
    %7 = vector.extract_strided_slice %0 {offsets = [4, 0], sizes = [1, 128], strides = [1, 1]} : vector<8x128xi32> to vector<1x128xi32>
    %8 = tpu.bitcast %7 : vector<1x128xi32> -> vector<1x128xf32>
    %9 = arith.mulf %4, %6 : vector<1x128xf32>
    %10 = arith.mulf %9, %8 : vector<1x128xf32>
    %11 = tpu.iota {dimensions = array<i32: 0>} : vector<16x128xi32>
    %12 = vector.broadcast %1 : vector<1x128xi32> to vector<16x128xi32>
    %13 = arith.cmpi eq, %11, %12 : vector<16x128xi32>
    %cst = arith.constant 0.000000e+00 : f32
    %14 = vector.shape_cast %10 : vector<1x128xf32> to vector<1x128xf32>
    %15 = vector.broadcast %14 : vector<1x128xf32> to vector<16x128xf32>
    %16 = vector.broadcast %cst : f32 to vector<16x128xf32>
    %17 = arith.select %13, %15, %16 : vector<16x128xi1>, vector<16x128xf32>
    %18 = vector.broadcast %2 : vector<1x128xi32> to vector<16x128xi32>
    %19 = arith.cmpi eq, %11, %18 : vector<16x128xi32>
    %cst_1 = arith.constant 1.000000e+00 : f32
    %cst_2 = arith.constant 0.000000e+00 : f32
    %20 = vector.broadcast %cst_1 : f32 to vector<16x128xf32>
    %21 = vector.broadcast %cst_2 : f32 to vector<16x128xf32>
    %22 = arith.select %19, %20, %21 : vector<16x128xi1>, vector<16x128xf32>
    %cst_3 = arith.constant dense<0.000000e+00> : vector<16x16xf32>
    %23 = tpu.matmul %17, %22, %cst_3 {dimension_numbers = #tpu.dot_dimension_numbers<[1], [1], [0], [0], [0, 0, 1, 0], [], []>} : vector<16x128xf32>, vector<16x128xf32>, vector<16x16xf32> -> vector<16x16xf32>
    %c0_4 = arith.constant 0 : index
    %c0_5 = arith.constant 0 : index
    %24 = vector.load %arg1[%c0_4, %c0_5] : memref<32x128xf32, #tpu.memory_space<vmem>>, vector<32x128xf32>
    %25 = vector.extract_strided_slice %24 {offsets = [0, 0], sizes = [16, 128], strides = [1, 1]} : vector<32x128xf32> to vector<16x128xf32>
    %26 = vector.extract_strided_slice %24 {offsets = [16, 0], sizes = [16, 128], strides = [1, 1]} : vector<32x128xf32> to vector<16x128xf32>
    %27 = arith.mulf %25, %26 : vector<16x128xf32>
    %cst_6 = arith.constant dense<0.000000e+00> : vector<16x128xf32>
    %28 = tpu.matmul %23, %27, %cst_6 {dimension_numbers = #tpu.dot_dimension_numbers<[1], [0], [0], [1], [0, 0, 1, 1], [], []>} : vector<16x16xf32>, vector<16x128xf32>, vector<16x128xf32> -> vector<16x128xf32>
    %29 = arith.addf %27, %28 : vector<16x128xf32>
    %cst_7 = arith.constant dense<0.000000e+00> : vector<16x128xf32>
    %30 = tpu.matmul %23, %28, %cst_7 {dimension_numbers = #tpu.dot_dimension_numbers<[1], [0], [0], [1], [0, 0, 1, 1], [], []>} : vector<16x16xf32>, vector<16x128xf32>, vector<16x128xf32> -> vector<16x128xf32>
    %31 = arith.addf %29, %30 : vector<16x128xf32>
    %cst_8 = arith.constant dense<0.000000e+00> : vector<16x128xf32>
    %32 = tpu.matmul %23, %30, %cst_8 {dimension_numbers = #tpu.dot_dimension_numbers<[1], [0], [0], [1], [0, 0, 1, 1], [], []>} : vector<16x16xf32>, vector<16x128xf32>, vector<16x128xf32> -> vector<16x128xf32>
    %33 = arith.addf %31, %32 : vector<16x128xf32>
    %c0_9 = arith.constant 0 : index
    %c0_10 = arith.constant 0 : index
    %34 = vector.load %arg2[%c0_9, %c0_10] : memref<16x128xf32, #tpu.memory_space<vmem>>, vector<16x128xf32>
    tpu.vector_store %arg2[%c0_9, %c0_10], %33 {strides = array<i32>} : memref<16x128xf32, #tpu.memory_space<vmem>>, vector<16x128xf32>,
    return
  }
}

</mosaic_0001>

<llo_original>
// kernel: lightgcn_sp_forward.1
$region0: #{lightgcn_sp_forward.1}
  #allocation0 [shape = 'u32[]', space=smem, size = 0x4, offset = 0x4, fixed_abs, tag = 'smem constant byte address 0x4 - core index']
  #allocation1 [shape = 'u32[72,128]{1,0:T(1,128)}', space=vmem, size = 0x9000, scoped, tag = 'internal scratch']
  %s0 = inlined_call_operand.vmem [shape: s32[8,128], index: 0, kind: input, shape index: {}]
  %s1 = inlined_call_operand.vmem [shape: f32[32,128], index: 1, kind: input, shape index: {}]
  %s2 = inlined_call_operand.vmem [shape: f32[16,128], index: 2, kind: output, shape index: {}]
  %s3 = sld [smem:[#allocation0]]
  $region18: #{lightgcn_sp_forward.1} parent=0
    _
  %s5 = ssub.s32 1, %s3
  %s6 = scalar_select 0, %s5, %s3
  // Predicated region
  $region2: #{lightgcn_sp_forward.1} parent=0 // pred_check
    _
  $region3: #{lightgcn_sp_forward.1} parent=0 // pred_check_branch
    %8 = sbr.rel (0) target = $region5
  $region4: #{lightgcn_sp_forward.1} parent=0 // pred_region
    _
  $region5: #{lightgcn_sp_forward.1} parent=0 // pred_fallthru
    _
  // Predicated region
  $region6: #{lightgcn_sp_forward.1} parent=0 // pred_check
    _
  $region7: #{lightgcn_sp_forward.1} parent=0 // pred_check_branch
    %10 = sbr.rel (0) target = $region9
  $region8: #{lightgcn_sp_forward.1} parent=0 // pred_region
    _
  $region9: #{lightgcn_sp_forward.1} parent=0 // pred_fallthru
    _
  %v11 = vld [vmem:[%s0] sm:$0xff]
  %v13 = vrot.slane %v11, 1
  %v15 = vmul.f32 %v11, %v13
  %v16 = vrot.slane %v11, 2
  %v18 = vmul.f32 %v15, %v16
  %v19 = vlaneseq
  %v20 = vshrl.u32 %v19, 7
  %v21 = vadd.s32 %v20, 8
  %v22 = vperm.slane %v11, 0
  %vm23 = vcmp.eq.s32.totalorder %v20, %v22
  %vm24 = vcmp.eq.s32.totalorder %v21, %v22
  %v25 = vperm.slane %v18, 2
  %v26 = vsel %vm23, %v25, 0.0
  %v27 = vsel %vm24, %v25, 0.0
  %v28 = vperm.slane %v11, 1
  %vm29 = vcmp.eq.s32.totalorder %v20, %v28
  %vm30 = vcmp.eq.s32.totalorder %v21, %v28
  %v31 = vsel %vm29, 1.0, 0.0
  %v32 = vsel %vm30, 1.0, 0.0
  %33 = vmatpush.xpose.msra.mxu0 0.0
  %34 = vmatpush.xpose.msra.mxu0 0.0
  %35 = vmatpush.xpose.msra.mxu0 0.0
  %36 = vmatpush.xpose.msra.mxu0 0.0
  %37 = vmatpush.xpose.msra.mxu0 0.0
  %38 = vmatpush.xpose.msra.mxu0 0.0
  %39 = vmatpush.xpose.msra.mxu0 0.0
  %40 = vmatpush.xpose.msra.mxu0 0.0
  %41 = vmatpush.xpose.msra.mxu0 0.0
  %42 = vmatpush.xpose.msra.mxu0 0.0
  %43 = vmatpush.xpose.msra.mxu0 0.0
  %44 = vmatpush.xpose.msra.mxu0 0.0
  %45 = vmatpush.xpose.msra.mxu0 0.0
  %46 = vmatpush.xpose.msra.mxu0 0.0
  %47 = vmatpush.xpose.msra.mxu0 %v32
  %48 = vmatpush.xpose.msra.mxu0 %v31
  %49 = vmatmul.f32.gmra.mxu0 %v26
  %v50 = vpop.f32.mrf.mxu0
  %v51 = vadd.f32 0.0, %v50
  %52 = vmatmul.f32.gmra.mxu0 %v27
  %v53 = vpop.f32.mrf.mxu0
  %v54 = vadd.f32 0.0, %v53
  %55 = vdwg.mxu0
  %v56 = vld [vmem:[%s1] sm:$0xff]
  %v57 = vld [vmem:[%s1 + $0x8] sm:$0xff]
  %v58 = vld [vmem:[%s1 + $0x10] sm:$0xff]
  %v59 = vld [vmem:[%s1 + $0x18] sm:$0xff]
  %v60 = vmul.f32 %v56, %v58
  %v61 = vmul.f32 %v57, %v59
  %vm62 = vcmask 130048
  %v64 = vsel %vm62, %v51, 0
  %v67 = vsel %vm62, %v54, 0
  %69 = vmatpush.msra.mxu0 0.0
  %70 = vmatpush.msra.mxu0 0.0
  %71 = vmatpush.msra.mxu0 0.0
  %72 = vmatpush.msra.mxu0 0.0
  %73 = vmatpush.msra.mxu0 0.0
  %74 = vmatpush.msra.mxu0 0.0
  %75 = vmatpush.msra.mxu0 0.0
  %76 = vmatpush.msra.mxu0 0.0
  %77 = vmatpush.msra.mxu0 0.0
  %78 = vmatpush.msra.mxu0 0.0
  %79 = vmatpush.msra.mxu0 0.0
  %80 = vmatpush.msra.mxu0 0.0
  %81 = vmatpush.msra.mxu0 0.0
  %82 = vmatpush.msra.mxu0 0.0
  %83 = vmatpush.msra.mxu0 %v61
  %84 = vmatpush.msra.mxu0 %v60
  %85 = vmatmul.f32.gmra.mxu0 %v64
  %v86 = vpop.f32.mrf.mxu0
  %v87 = vadd.f32 0.0, %v86
  %88 = vmatmul.f32.gmra.mxu0 %v67
  %v89 = vpop.f32.mrf.mxu0
  %v90 = vadd.f32 0.0, %v89
  %91 = vdwg.mxu0
  %v92 = vadd.f32 %v60, %v87
  %v93 = vadd.f32 %v61, %v90
  %94 = vmatpush.msra.mxu0 0.0
  %95 = vmatpush.msra.mxu0 0.0
  %96 = vmatpush.msra.mxu0 0.0
  %97 = vmatpush.msra.mxu0 0.0
  %98 = vmatpush.msra.mxu0 0.0
  %99 = vmatpush.msra.mxu0 0.0
  %100 = vmatpush.msra.mxu0 0.0
  %101 = vmatpush.msra.mxu0 0.0
  %102 = vmatpush.msra.mxu0 0.0
  %103 = vmatpush.msra.mxu0 0.0
  %104 = vmatpush.msra.mxu0 0.0
  %105 = vmatpush.msra.mxu0 0.0
  %106 = vmatpush.msra.mxu0 0.0
  %107 = vmatpush.msra.mxu0 0.0
  %108 = vmatpush.msra.mxu0 %v90
  %109 = vmatpush.msra.mxu0 %v87
  %110 = vmatmul.f32.gmra.mxu0 %v64
  %v111 = vpop.f32.mrf.mxu0
  %v112 = vadd.f32 0.0, %v111
  %113 = vmatmul.f32.gmra.mxu0 %v67
  %v114 = vpop.f32.mrf.mxu0
  %v115 = vadd.f32 0.0, %v114
  %116 = vdwg.mxu0
  %v117 = vadd.f32 %v92, %v112
  %v118 = vadd.f32 %v93, %v115
  %119 = vmatpush.msra.mxu0 0.0
  %120 = vmatpush.msra.mxu0 0.0
  %121 = vmatpush.msra.mxu0 0.0
  %122 = vmatpush.msra.mxu0 0.0
  %123 = vmatpush.msra.mxu0 0.0
  %124 = vmatpush.msra.mxu0 0.0
  %125 = vmatpush.msra.mxu0 0.0
  %126 = vmatpush.msra.mxu0 0.0
  %127 = vmatpush.msra.mxu0 0.0
  %128 = vmatpush.msra.mxu0 0.0
  %129 = vmatpush.msra.mxu0 0.0
  %130 = vmatpush.msra.mxu0 0.0
  %131 = vmatpush.msra.mxu0 0.0
  %132 = vmatpush.msra.mxu0 0.0
  %133 = vmatpush.msra.mxu0 %v115
  %134 = vmatpush.msra.mxu0 %v112
  %135 = vmatmul.f32.gmra.mxu0 %v64
  %v136 = vpop.f32.mrf.mxu0
  %v137 = vadd.f32 0.0, %v136
  %138 = vmatmul.f32.gmra.mxu0 %v67
  %v139 = vpop.f32.mrf.mxu0
  %v140 = vadd.f32 0.0, %v139
  %141 = vdwg.mxu0
  %v142 = vadd.f32 %v117, %v137
  %v143 = vadd.f32 %v118, %v140
  %144 = vst [vmem:[%s2] sm:$0xff] %v142
  %145 = vst [vmem:[%s2 + $0x8] sm:$0xff] %v143
  // Predicated region
  $region10: #{lightgcn_sp_forward.1} parent=0 // pred_check
    _
  $region11: #{lightgcn_sp_forward.1} parent=0 // pred_check_branch
    %147 = sbr.rel (0) target = $region13
  $region12: #{lightgcn_sp_forward.1} parent=0 // pred_region
    _
  $region13: #{lightgcn_sp_forward.1} parent=0 // pred_fallthru
    _
  // Predicated region
  $region14: #{lightgcn_sp_forward.1} parent=0 // pred_check
    _
  $region15: #{lightgcn_sp_forward.1} parent=0 // pred_check_branch
    %149 = sbr.rel (0) target = $region17
  $region16: #{lightgcn_sp_forward.1} parent=0 // pred_region
    _
  $region17: #{lightgcn_sp_forward.1} parent=0 // pred_fallthru
    _

</llo_original>
